<compile_context>
chip_gen: v7x
topology: tpu7x:2x2x1
jax: 0.10.0
libtpu: 0.0.40
codegen_flags: <defaults>
</compile_context>

<pallas_src>
import jax
import jax.numpy as jnp
from jax.experimental import pallas as pl
from jax.experimental.pallas import tpu as pltpu

_MAX_INFLIGHT_DMAS = 8   # DMA window depth per core (enough to saturate HBM)
_NUM_BATCH_SPLITS = 2    # grid size; shards across the 2 TCs on v7x


def _make_gather_kernel(per_core: int, window: int):
    """Kernel factory: `per_core`/`window` are trace-time constants."""

    def _gather_dma_kernel(ids_ref, feat_hbm, out_hbm, copy_sems):
        # ids_ref:   (B_pad,) int32, scalar-prefetched into SMEM
        # feat_hbm:  (N, R*D) in HBM (pl.ANY) — never staged through VMEM
        # out_hbm:   (B_pad, R*D) in HBM (pl.ANY) — written directly by DMA
        # copy_sems: (window,) DMA semaphores (slot = j % window)
        base = pl.program_id(0) * per_core

        descs = []
        for j in range(per_core):
            i = base + j
            # One SMEM read per row; the descriptor is built once and reused
            # for both .start() and .wait() (no sld re-issue after a wait).
            desc = pltpu.make_async_copy(
                feat_hbm.at[ids_ref[i]],      # gathered source row
                out_hbm.at[i],                # stacked destination row
                copy_sems.at[j % window],
            )
            descs.append(desc)
            if j >= window:
                # Free this semaphore slot before reusing it: bounds the
                # number of in-flight DMAs to `window`.
                descs[j - window].wait()
            desc.start()

        # Drain the tail of the window.
        for j in range(max(0, per_core - window), per_core):
            descs[j].wait()

    return _gather_dma_kernel


def vision_embedding_gather(feature_bank: jax.Array, image_ids: jax.Array) -> jax.Array:
    """Pallas path: gather feature_bank[image_ids] and stack along batch.

    feature_bank: [N, R, D]
    image_ids:    [B] integer ids
    returns:      [B, R, D]
    """
    n, r, d = feature_bank.shape
    b = int(image_ids.shape[0])

    # Bounds safety: an out-of-range id must not drive an OOB DMA.
    ids = jnp.clip(image_ids.astype(jnp.int32), 0, n - 1)

    # Split the batch over the grid; pad to a multiple of the split count so
    # every grid step handles the same (static) number of rows.
    splits = min(_NUM_BATCH_SPLITS, b) if b > 0 else 1
    per_core = -(-b // splits)
    b_pad = per_core * splits
    if b_pad != b:
        ids = jnp.pad(ids, (0, b_pad - b), mode="edge")
    window = max(1, min(per_core, _MAX_INFLIGHT_DMAS))

    # Lane-dense, contiguous rows: one row == one contiguous DMA of R*D elems.
    # (For production shapes, pad D so R*D*itemsize is >= 512B-aligned.)
    bank2d = feature_bank.reshape(n, r * d)

    itemsize = jnp.dtype(feature_bank.dtype).itemsize
    bytes_moved = 2 * b * r * d * itemsize  # HBM read + write of gathered rows

    grid_spec = pltpu.PrefetchScalarGridSpec(
        num_scalar_prefetch=1,                              # ids -> SMEM
        grid=(splits,),
        in_specs=[pl.BlockSpec(memory_space=pl.ANY)],       # bank stays in HBM
        out_specs=pl.BlockSpec(memory_space=pl.ANY),        # output written via DMA
        scratch_shapes=[pltpu.SemaphoreType.DMA((window,))],
    )

    out2d = pl.pallas_call(
        _make_gather_kernel(per_core, window),
        out_shape=jax.ShapeDtypeStruct((b_pad, r * d), feature_bank.dtype),
        grid_spec=grid_spec,
        compiler_params=pltpu.CompilerParams(
            dimension_semantics=("parallel",),
            has_side_effects=True,
        ),
        cost_estimate=pl.CostEstimate(
            flops=0, transcendentals=0, bytes_accessed=bytes_moved
        ),
    )(ids, bank2d)

    return out2d[:b].reshape(b, r, d)


def vision_embedding_forward(
    feature_bank: jax.Array,
    image_ids: jax.Array,
    min_pallas_bytes: int = 256 * 1024,
) -> jax.Array:
    """Dispatcher: tiny gathers go to XLA (launch + per-DMA overhead would
    dominate); anything bandwidth-relevant goes through the Pallas kernel."""
    n, r, d = feature_bank.shape
    b = int(image_ids.shape[0])
    moved = b * r * d * jnp.dtype(feature_bank.dtype).itemsize
    if moved < min_pallas_bytes:
        ids = jnp.clip(image_ids.astype(jnp.int32), 0, n - 1)
        return feature_bank[ids]
    return vision_embedding_gather(feature_bank, image_ids)


if __name__ == "__main__":
    key = jax.random.PRNGKey(0)
    k_bank, _ = jax.random.split(key)

    # Synthetic "feature store": 16 images, 8 regions, hidden=32 (R*D = 256).
    num_images, num_regions, feat_dim = 16, 8, 32
    feature_bank = jax.random.normal(
        k_bank, (num_images, num_regions, feat_dim), dtype=jnp.float32
    )

    # Batch of image ids (stand-ins for the basenames of the .npy files).
    image_ids = jnp.array([3, 11], dtype=jnp.int32)  # batch = 2

    # Exercise the Pallas kernel path directly.
    out = vision_embedding_gather(feature_bank, image_ids)
    out = jax.block_until_ready(out)

    # Reference: torch.stack([bank[i] for i in ids]) == bank[ids]
    ref = feature_bank[image_ids]
    assert out.shape == (2, num_regions, feat_dim)
    assert jnp.allclose(out, ref), "mismatch vs reference gather"

    # Odd batch size (tail padding path).
    out3 = jax.block_until_ready(
        vision_embedding_gather(feature_bank, jnp.array([5, 0, 9], jnp.int32))
    )
    assert jnp.allclose(out3, feature_bank[jnp.array([5, 0, 9])])

    print("KERNEL_OK")
</pallas_src>

<mosaic_0001>
module attributes {stable_mosaic.version = 11 : i64} {
  func.func @_gather_dma_kernel(%arg0: i32, %arg1: memref<2xi32, #tpu.memory_space<smem>>, %arg2: memref<16x256xf32, #tpu.memory_space<any>>, %arg3: memref<2x256xf32, #tpu.memory_space<any>>, %arg4: memref<1x!tpu.dma_semaphore, #tpu.memory_space<semaphore_mem>>) attributes {dimension_semantics = [#tpu.dimension_semantics<parallel>], iteration_bounds = array<i64: 2>, scalar_prefetch = 1 : i64, scratch_operands = 1 : i64, tpu.core_type = #tpu.core_type<tc>, window_params = [{}, {}]} {
    %c1_i32 = arith.constant 1 : i32
    %0 = arith.muli %arg0, %c1_i32 : i32
    %c0_i32 = arith.constant 0 : i32
    %1 = arith.addi %0, %c0_i32 : i32
    %2 = arith.index_cast %1 : i32 to index
    %3 = memref.load %arg1[%2] : memref<2xi32, #tpu.memory_space<smem>>
    %c0_i32_0 = arith.constant 0 : i32
    %c0_i32_1 = arith.constant 0 : i32
    %4 = tpu.memref_slice %arg2[%3, %c0_i32_1] : memref<16x256xf32, #tpu.memory_space<any>> -> memref<1x256xf32, #tpu.memory_space<any>>
    %5 = tpu.memref_squeeze %4 : memref<1x256xf32, #tpu.memory_space<any>> -> memref<256xf32, #tpu.memory_space<any>>
    %c0_i32_2 = arith.constant 0 : i32
    %6 = tpu.memref_slice %arg3[%1, %c0_i32_2] : memref<2x256xf32, #tpu.memory_space<any>> -> memref<1x256xf32, #tpu.memory_space<any>>
    %7 = tpu.memref_squeeze %6 : memref<1x256xf32, #tpu.memory_space<any>> -> memref<256xf32, #tpu.memory_space<any>>
    %8 = tpu.memref_slice %arg4[%c0_i32_0] : memref<1x!tpu.dma_semaphore, #tpu.memory_space<semaphore_mem>> -> memref<1x!tpu.dma_semaphore, #tpu.memory_space<semaphore_mem>>
    %9 = tpu.memref_squeeze %8 : memref<1x!tpu.dma_semaphore, #tpu.memory_space<semaphore_mem>> -> memref<!tpu.dma_semaphore, #tpu.memory_space<semaphore_mem>>
    tpu.enqueue_dma source(%5 : memref<256xf32, #tpu.memory_space<any>>) target(%7 : memref<256xf32, #tpu.memory_space<any>>) target_semaphore(%9 : memref<!tpu.dma_semaphore, #tpu.memory_space<semaphore_mem>>)
    %c0_i32_3 = arith.constant 0 : i32
    %c0_i32_4 = arith.constant 0 : i32
    %10 = tpu.memref_slice %arg2[%3, %c0_i32_4] : memref<16x256xf32, #tpu.memory_space<any>> -> memref<1x256xf32, #tpu.memory_space<any>>
    %11 = tpu.memref_squeeze %10 : memref<1x256xf32, #tpu.memory_space<any>> -> memref<256xf32, #tpu.memory_space<any>>
    %c0_i32_5 = arith.constant 0 : i32
    %12 = tpu.memref_slice %arg3[%1, %c0_i32_5] : memref<2x256xf32, #tpu.memory_space<any>> -> memref<1x256xf32, #tpu.memory_space<any>>
    %13 = tpu.memref_squeeze %12 : memref<1x256xf32, #tpu.memory_space<any>> -> memref<256xf32, #tpu.memory_space<any>>
    %14 = tpu.memref_slice %arg4[%c0_i32_3] : memref<1x!tpu.dma_semaphore, #tpu.memory_space<semaphore_mem>> -> memref<1x!tpu.dma_semaphore, #tpu.memory_space<semaphore_mem>>
    %15 = tpu.memref_squeeze %14 : memref<1x!tpu.dma_semaphore, #tpu.memory_space<semaphore_mem>> -> memref<!tpu.dma_semaphore, #tpu.memory_space<semaphore_mem>>
    tpu.wait_dma2 semaphore(%15 : memref<!tpu.dma_semaphore, #tpu.memory_space<semaphore_mem>>) src(%11 : memref<256xf32, #tpu.memory_space<any>>) dst(%13 : memref<256xf32, #tpu.memory_space<any>>)
    return
  }
}

</mosaic_0001>

<llo_original>
// kernel: tpu_custom_call.1
$region0: #{tpu_custom_call.1}
  #allocation0 [shape = 'u32[]', space=smem, size = 0x4, offset = 0x4, fixed_abs, tag = 'smem constant byte address 0x4 - core index']
  #allocation1 [shape = 'u32[144,128]{1,0:T(1,128)}', space=vmem, size = 0x12000, scoped, tag = 'internal scratch']
  #allocation2 [shape = 's32[1]{0}', space=sflag, size = 0x4, scoped, tag = 'scratch operand']
  #allocation3 [shape = 's32[1]{0}', space=sflag, size = 0x4, scoped, tag = 'scoped memory for tpu_custom_call.1']
  #allocation4 [shape = 'u8[512]{0}', space=smem, size = 0x200, scoped, tag = 'prefetched SMEM operand 0']
  #allocation5 [shape = 's32[]', space=sflag, size = 0x4, offset = 0, fixed_abs, tag = 'sflag constant byte address 0x0 - dummy sync flag']
  %s0 = inlined_call_operand.hbm [shape: s32[2], index: 0, kind: input, shape index: {}]
  %s1 = inlined_call_operand.hbm [shape: f32[16,256], index: 1, kind: input, shape index: {}]
  %s2 = inlined_call_operand.hbm [shape: f32[2,256], index: 2, kind: output, shape index: {}]
  %s3 = sld [smem:[#allocation0]]
  $region9: #{tpu_custom_call.1} parent=0
    _
  %s5 = ssub.s32 1, %s3
  %s6 = scalar_select 0, %s5, %s3
  %8 = dma.hbm_to_smem %s0, 16, [#allocation4], [#allocation3]
  %9 = dma.done [#allocation3], 16
  %10 = sfence
  loop: start=0, step=1, limit=2
  $region2: #{tpu_custom_call.1} parent=0 // loop_pre_header
    _
  $region3: #{tpu_custom_call.1} parent=0 // loop_header
    %s12 = sphi 0, %s16
    %p13 = scmp.ge.s32.totalorder %s12, 2
  $region4: #{tpu_custom_call.1} parent=0 // loop_header_branch
    %15 = sbr.rel (%p13) target = $region8
  $region5: #{tpu_custom_call.1} parent=0 // loop_body
    #allocation6 [shape = 'u32[3]{0}', space=smem, size = 0xc, scoped, tag = 'DMA stride descriptor']
    %s17 = sadd.s32 %s12, 1
    %s18 = sld [smem:[#allocation4 + %s12]]
    %s19 = sshrl.u32 %s18, 3
    %s20 = sand.u32 %s18, 7
    %s21 = smul.u32 %s19, 16
    %s22 = sadd.s32 %s20, %s21
    %s23 = smul.addr %s22, 16
    %s24 = scalar_lea.hbm %s1, %s23
    %s25 = sshrl.u32 %s12, 1
    %s26 = sand.u32 %s12, 1
    %s27 = smul.u32 %s25, 4
    %s28 = sadd.s32 %s26, %s27
    %s29 = smul.addr %s28, 16
    %s30 = scalar_lea.hbm %s2, %s29
    %s32 = sshll.u32 1, 14
    %s33 = sxor.u32 4294967295, %s32
    %s36 = sshll.u32 3, 24
    %s37 = sxor.u32 4294967295, %s36
    %s38 = sand.u32 0, %s37
    %s40 = sor.u32 %s38, 0
    %43 = sst [smem:[#allocation6]] 128
    %s44 = scalar_lea.smem [#allocation6], 1
    %45 = sst [smem:[%s44]] 32
    %s46 = scalar_lea.smem [#allocation6], 2
    %47 = sst [smem:[%s46]] 1
    %49 = dma.general %s24, 32, %s30, [#allocation2], [#allocation5], [#allocation6], %s40, 0
    %51 = dma.done [#allocation2], 32
  $region6: #{tpu_custom_call.1} parent=0 // loop_footer
    %s16 = sadd.s32 1, %s12
  $region7: #{tpu_custom_call.1} parent=0 // loop_footer_branch
    %11 = sbr.rel target = $region3
  $region8: #{tpu_custom_call.1} parent=0 // loop_exit
    _
  %52 = vsyncmov [#allocation2]
  %s53 = vpop.sfrf %52
  %p54 = scmp.eq.s32.totalorder %s53, 0
  %p55 = pneg %p54
  %57 = shalt.err (%p55)

</llo_original>
